<compile_context>
chip_gen: v7x
topology: tpu7x:2x2x1
jax: 0.10.0
libtpu: 0.0.40
codegen_flags: <defaults>
</compile_context>

<pallas_src>
import functools

import jax
import jax.numpy as jnp
from jax.experimental import pallas as pl
from jax.experimental.pallas import tpu as pltpu


def _round_up(x: int, m: int) -> int:
    return ((x + m - 1) // m) * m


def _choose_tm(m: int) -> int:
    """Pick the M (lane) tile: big enough to amortize per-step overhead, but
    keep >= 2 grid steps when there is enough work (v7x megacore)."""
    tm = min(4096, _round_up(m, 128))
    if m > 1024 and _round_up(m, tm) // tm < 2:
        tm = _round_up((m + 1) // 2, 128)
    return max(tm, 128)


def _patch_embed_kernel(a_ref, w_ref, b_ref, o_ref):
    # a_ref: (K,  TM)  patch columns   (streamed, one tile per grid step)
    # w_ref: (E,  K)   projection      (resident across the grid)
    # b_ref: (E,  1)   bias, f32       (resident across the grid)
    # o_ref: (E,  TM)  embedded patches (lane-dense, TM % 128 == 0)
    acc = jnp.dot(w_ref[...], a_ref[...], preferred_element_type=jnp.float32)
    o_ref[...] = (acc + b_ref[...]).astype(o_ref.dtype)


def _im2col_t(x, kernel_size, stride, pad):
    """(N, C, H, W) -> (C*k*k, N*Hp*Wp); row index order (c, a, b) matches the
    OIHW weight flatten, column order is (n, hp, wp)."""
    n, c, h, w = x.shape
    k, p = kernel_size, stride
    if pad > 0:
        # TODO(synk): reflect-pad path (kernel_size > patch_size) is untested by
        # the self-check below; only the pad == 0 default is exercised.
        x = jnp.pad(x, ((0, 0), (0, 0), (pad, pad), (pad, pad)), mode="reflect")
    hp = (h + 2 * pad - k) // p + 1
    wp = (w + 2 * pad - k) // p + 1
    cols = []
    for a in range(k):
        for b in range(k):
            cols.append(x[:, :, a:a + p * (hp - 1) + 1:p, b:b + p * (wp - 1) + 1:p])
    col = jnp.stack(cols, axis=2)                  # (N, C, k*k, Hp, Wp)
    col = col.reshape(n, c, k * k, hp * wp)        # (N, C, k*k, Hp*Wp)
    col = col.transpose(1, 2, 0, 3)                # (C, k*k, N, Hp*Wp)
    return col.reshape(c * k * k, n * hp * wp), hp, wp


@functools.partial(jax.jit, static_argnames=("patch_size", "kernel_size"))
def patch_embed(x, weight, bias, *, patch_size=4, kernel_size=None):
    """Pallas PatchEmbed forward.

    x:      (N, C_in, H, W)
    weight: (embed_dim, C_in, k, k)   (PyTorch Conv2d OIHW layout)
    bias:   (embed_dim,)
    returns (N, embed_dim, Hp, Wp)
    """
    if kernel_size is None:
        kernel_size = patch_size
    pad = (kernel_size - patch_size + 1) // 2

    n = x.shape[0]
    embed_dim = weight.shape[0]

    a, hp, wp = _im2col_t(x, kernel_size, patch_size, pad)    # (K, M)
    kk, m = a.shape

    tm = _choose_tm(m)
    m_pad = _round_up(m, tm)
    if m_pad > m:
        a = jnp.pad(a, ((0, 0), (0, m_pad - m)))

    # Note: weight is quantized to x.dtype (e.g. bf16 if activations are bf16);
    # MXU accumulation and the bias add stay f32, so accuracy is unchanged.
    w_mat = weight.reshape(embed_dim, kk).astype(x.dtype)     # (E, K)
    b_mat = bias.astype(jnp.float32).reshape(embed_dim, 1)    # (E, 1)

    out = pl.pallas_call(
        _patch_embed_kernel,
        out_shape=jax.ShapeDtypeStruct((embed_dim, m_pad), x.dtype),
        grid_spec=pltpu.PrefetchScalarGridSpec(
            num_scalar_prefetch=0,
            grid=(m_pad // tm,),
            in_specs=[
                pl.BlockSpec((kk, tm), lambda i: (0, i)),         # A^T, tiled on M
                pl.BlockSpec((embed_dim, kk), lambda i: (0, 0)),  # weight, resident
                pl.BlockSpec((embed_dim, 1), lambda i: (0, 0)),   # bias, resident
            ],
            out_specs=pl.BlockSpec((embed_dim, tm), lambda i: (0, i)),
        ),
        compiler_params=pltpu.CompilerParams(
            dimension_semantics=("parallel",),
            vmem_limit_bytes=32 * 1024 * 1024,
            # Let XLA fuse the im2col permute/pad into the A input DMA instead of
            # materializing an extra x-sized HBM buffer.
            allow_input_fusion=[True, False, False],
        ),
    )(a, w_mat, b_mat)

    out = out[:, :m]                                # strip M padding
    out = out.reshape(embed_dim, n, hp, wp)         # (E, N, Hp, Wp)
    return out.transpose(1, 0, 2, 3)                # (N, E, Hp, Wp)  -- cheap outer swap


def _reference(x, weight, bias, patch_size, kernel_size):
    """Pure-JAX reference (zero padding case, i.e. kernel_size == patch_size)."""
    out = jax.lax.conv_general_dilated(
        x, weight,
        window_strides=(patch_size, patch_size),
        padding="VALID",
        dimension_numbers=("NCHW", "OIHW", "NCHW"),
        precision=jax.lax.Precision.HIGHEST,
    )
    return out + bias.reshape(1, -1, 1, 1)


if __name__ == "__main__":
    key = jax.random.PRNGKey(0)
    k1, k2, k3 = jax.random.split(key, 3)

    n, c_in, h, w = 2, 3, 16, 16
    patch_size, embed_dim = 4, 32

    x = jax.random.normal(k1, (n, c_in, h, w), dtype=jnp.float32)
    weight = 0.1 * jax.random.normal(
        k2, (embed_dim, c_in, patch_size, patch_size), dtype=jnp.float32)
    bias = 0.1 * jax.random.normal(k3, (embed_dim,), dtype=jnp.float32)

    out = patch_embed(x, weight, bias, patch_size=patch_size)
    out = jax.block_until_ready(out)

    ref = _reference(x, weight, bias, patch_size, patch_size)
    assert out.shape == (n, embed_dim, h // patch_size, w // patch_size), out.shape
    assert jnp.allclose(out, ref, atol=1e-2, rtol=1e-2), float(
        jnp.max(jnp.abs(out - ref)))
    print("KERNEL_OK")
</pallas_src>

<mosaic_0001>
module attributes {stable_mosaic.version = 11 : i64} {
  func.func @_patch_embed_kernel(%arg0: i32, %arg1: memref<48x128xf32, #tpu.memory_space<vmem>>, %arg2: memref<32x48xf32, #tpu.memory_space<vmem>>, %arg3: memref<32x1xf32, #tpu.memory_space<vmem>>, %arg4: memref<32x128xf32, #tpu.memory_space<vmem>>) attributes {dimension_semantics = [#tpu.dimension_semantics<parallel>], iteration_bounds = array<i64: 1>, scalar_prefetch = 0 : i64, scratch_operands = 0 : i64, tpu.core_type = #tpu.core_type<tc>, window_params = [{transform_indices = @transform_0, window_bounds = array<i64: 48, 128>}, {pipeline_mode = #tpu.pipeline_mode<synchronous>, transform_indices = @transform_1, window_bounds = array<i64: 32, 48>}, {pipeline_mode = #tpu.pipeline_mode<synchronous>, transform_indices = @transform_2, window_bounds = array<i64: 32, 1>}, {transform_indices = @transform_3, window_bounds = array<i64: 32, 128>}]} {
    %c0 = arith.constant 0 : index
    %c0_0 = arith.constant 0 : index
    %0 = vector.load %arg2[%c0, %c0_0] : memref<32x48xf32, #tpu.memory_space<vmem>>, vector<32x48xf32>
    %c0_1 = arith.constant 0 : index
    %c0_2 = arith.constant 0 : index
    %1 = vector.load %arg1[%c0_1, %c0_2] : memref<48x128xf32, #tpu.memory_space<vmem>>, vector<48x128xf32>
    %cst = arith.constant dense<0.000000e+00> : vector<32x128xf32>
    %2 = tpu.matmul %0, %1, %cst {dimension_numbers = #tpu.dot_dimension_numbers<[1], [0], [0], [1], [0, 0, 1, 1], [], []>} : vector<32x48xf32>, vector<48x128xf32>, vector<32x128xf32> -> vector<32x128xf32>
    %c0_3 = arith.constant 0 : index
    %c0_4 = arith.constant 0 : index
    %3 = vector.load %arg3[%c0_3, %c0_4] : memref<32x1xf32, #tpu.memory_space<vmem>>, vector<32x1xf32>
    %4 = vector.broadcast %3 : vector<32x1xf32> to vector<32x128xf32>
    %5 = arith.addf %2, %4 : vector<32x128xf32>
    %c0_5 = arith.constant 0 : index
    %c0_6 = arith.constant 0 : index
    %6 = vector.load %arg4[%c0_5, %c0_6] : memref<32x128xf32, #tpu.memory_space<vmem>>, vector<32x128xf32>
    tpu.vector_store %arg4[%c0_5, %c0_6], %5 {strides = array<i32>} : memref<32x128xf32, #tpu.memory_space<vmem>>, vector<32x128xf32>,
    return
  }
  func.func @transform_0(%arg0: i32) -> (i32, i32) {
    %c0_i32 = arith.constant 0 : i32
    %c0_i32_0 = arith.constant 0 : i32
    return %c0_i32, %arg0 : i32, i32
  }
  func.func @transform_1(%arg0: i32) -> (i32, i32) {
    %c0_i32 = arith.constant 0 : i32
    %c0_i32_0 = arith.constant 0 : i32
    %c0_i32_1 = arith.constant 0 : i32
    return %c0_i32, %c0_i32_0 : i32, i32
  }
  func.func @transform_2(%arg0: i32) -> (i32, i32) {
    %c0_i32 = arith.constant 0 : i32
    %c0_i32_0 = arith.constant 0 : i32
    %c0_i32_1 = arith.constant 0 : i32
    return %c0_i32, %c0_i32_0 : i32, i32
  }
  func.func @transform_3(%arg0: i32) -> (i32, i32) {
    %c0_i32 = arith.constant 0 : i32
    %c0_i32_0 = arith.constant 0 : i32
    return %c0_i32, %arg0 : i32, i32
  }
}

</mosaic_0001>

<llo_original>
// kernel: patch_embed.2
$region0: #{patch_embed.2}
  #allocation0 [shape = 'u32[]', space=smem, size = 0x4, offset = 0x4, fixed_abs, tag = 'smem constant byte address 0x4 - core index']
  #allocation1 [shape = 'u32[144,128]{1,0:T(1,128)}', space=vmem, size = 0x12000, scoped, tag = 'internal scratch']
  #allocation2 [shape = 'u32[2048]{0}', space=vmem, size = 0x2000, scoped, tag = 'scoped memory for patch_embed.2']
  #allocation3 [shape = 'u32[2048]{0}', space=vmem, size = 0x2000, scoped, tag = 'scoped memory for patch_embed.2']
  #allocation4 [shape = 'u32[2048]{0}', space=vmem, size = 0x2000, scoped, tag = 'scoped memory for patch_embed.2']
  #allocation5 [shape = 'u32[2048]{0}', space=vmem, size = 0x2000, scoped, tag = 'scoped memory for patch_embed.2']
  #allocation6 [shape = 'u32[2048]{0}', space=vmem, size = 0x2000, scoped, tag = 'scoped memory for patch_embed.2']
  %s0 = inlined_call_operand.vmem [shape: f32[32,48], index: 0, kind: input, shape index: {}]
  %s1 = inlined_call_operand.vmem [shape: f32[32,1], index: 1, kind: input, shape index: {}]
  %s2 = inlined_call_operand.vmem [shape: f32[48,32], index: 2, kind: input, shape index: {}]
  %s3 = inlined_call_operand.<no memory space> [shape: f32[], index: 3, kind: input, shape index: {}]
  %s4 = inlined_call_operand.vmem [shape: f32[32,128], index: 4, kind: output, shape index: {}]
  %s5 = sld [smem:[#allocation0]]
  $region22: #{patch_embed.2} parent=0
    _
  %s7 = ssub.s32 1, %s5
  %s8 = scalar_select 0, %s7, %s5
  %v9 = vstv %s3
  $region1: #{patch_embed.2} parent=0
    #allocation7 [shape = 'u8[24576]{0}', space=vmem, size = 0x6000, dematerialized = true, scoped, tag = 'FusionAdapter Buffer %fusion.1 = f32[48,128]{1,0:T(8,128)} fusion(%param_2.32, %param_3.15), kind=kLoop, calls=%fused_computation.17.clone, metadata={op_name="jit(patch_embed)/jit(_pad)/pad" stack_frame_id=13}']
    // Predicated region
    $region2: #{patch_embed.2} parent=1 // pred_check
      _
    $region3: #{patch_embed.2} parent=1 // pred_check_branch
      %11 = sbr.rel (0) target = $region5
    $region4: #{patch_embed.2} parent=1 // pred_region
      _
    $region5: #{patch_embed.2} parent=1 // pred_fallthru
      _
    // Predicated region
    $region6: #{patch_embed.2} parent=1 // pred_check
      _
    $region7: #{patch_embed.2} parent=1 // pred_check_branch
      %13 = sbr.rel (0) target = $region9
    $region8: #{patch_embed.2} parent=1 // pred_region
      _
    $region9: #{patch_embed.2} parent=1 // pred_fallthru
      _
    // Predicated region
    $region10: #{patch_embed.2} parent=1 // pred_check
      _
    $region11: #{patch_embed.2} parent=1 // pred_check_branch
      %15 = sbr.rel (0) target = $region13
    $region12: #{patch_embed.2} parent=1 // pred_region
      _
    $region13: #{patch_embed.2} parent=1 // pred_fallthru
      _
    %v16 = vld [vmem:[%s2] sm:$0xff]
    %v17 = vlaneseq
    %v18 = vand.u32 %v17, 127
    %vm20 = vcmp.lt.s32.totalorder %v18, 32
    %v21 = vsel %vm20, %v16, %v9
    %23 = vst [vmem:[#allocation7] sm:$0xff] %v21
    %s24 = scalar_lea.vmem %s2, 8
    %v25 = vld [vmem:[%s24] sm:$0xff]
    %v26 = vlaneseq
    %v27 = vand.u32 %v26, 127
    %vm29 = vcmp.lt.s32.totalorder %v27, 32
    %v30 = vsel %vm29, %v25, %v9
    %s31 = scalar_lea.vmem [#allocation7], 8
    %33 = vst [vmem:[%s31] sm:$0xff] %v30
    %s34 = scalar_lea.vmem %s2, 16
    %v35 = vld [vmem:[%s34] sm:$0xff]
    %v36 = vlaneseq
    %v37 = vand.u32 %v36, 127
    %vm39 = vcmp.lt.s32.totalorder %v37, 32
    %v40 = vsel %vm39, %v35, %v9
    %s41 = scalar_lea.vmem [#allocation7], 16
    %43 = vst [vmem:[%s41] sm:$0xff] %v40
    %s44 = scalar_lea.vmem %s2, 24
    %v45 = vld [vmem:[%s44] sm:$0xff]
    %v46 = vlaneseq
    %v47 = vand.u32 %v46, 127
    %vm49 = vcmp.lt.s32.totalorder %v47, 32
    %v50 = vsel %vm49, %v45, %v9
    %s51 = scalar_lea.vmem [#allocation7], 24
    %53 = vst [vmem:[%s51] sm:$0xff] %v50
    %s54 = scalar_lea.vmem %s2, 32
    %v55 = vld [vmem:[%s54] sm:$0xff]
    %v56 = vlaneseq
    %v57 = vand.u32 %v56, 127
    %vm59 = vcmp.lt.s32.totalorder %v57, 32
    %v60 = vsel %vm59, %v55, %v9
    %s61 = scalar_lea.vmem [#allocation7], 32
    %63 = vst [vmem:[%s61] sm:$0xff] %v60
    %s64 = scalar_lea.vmem %s2, 40
    %v65 = vld [vmem:[%s64] sm:$0xff]
    %v66 = vlaneseq
    %v67 = vand.u32 %v66, 127
    %vm69 = vcmp.lt.s32.totalorder %v67, 32
    %v70 = vsel %vm69, %v65, %v9
    %s71 = scalar_lea.vmem [#allocation7], 40
    %73 = vst [vmem:[%s71] sm:$0xff] %v70
    %v74 = vld [vmem:[%s0] sm:$0xff]
    %v75 = vld [vmem:[%s0 + $0x8] sm:$0xff]
    %v76 = vld [vmem:[%s0 + $0x10] sm:$0xff]
    %v77 = vld [vmem:[%s0 + $0x18] sm:$0xff]
    %v78 = vld [vmem:[#allocation7] sm:$0xff]
    %v79 = vld [vmem:[#allocation7 + $0x8] sm:$0xff]
    %v80 = vld [vmem:[#allocation7 + $0x10] sm:$0xff]
    %v81 = vld [vmem:[#allocation7 + $0x18] sm:$0xff]
    %v82 = vld [vmem:[#allocation7 + $0x20] sm:$0xff]
    %v83 = vld [vmem:[#allocation7 + $0x28] sm:$0xff]
    %v84 = vld [vmem:[%s1] sm:$0xff]
    %v85 = vld [vmem:[%s1 + $0x8] sm:$0xff]
    %v86 = vld [vmem:[%s1 + $0x10] sm:$0xff]
    %v87 = vld [vmem:[%s1 + $0x18] sm:$0xff]
    %89 = vset.pattern.permute.xlu0 0
    %90 = vperm.xlu0 %89, %v84
    %v91 = vpop.permute.xlu0 %90
    %94 = vset.pattern.permute.xlu0 0
    %95 = vperm.xlu0 %94, %v85
    %v96 = vpop.permute.xlu0 %95
    %99 = vset.pattern.permute.xlu0 0
    %100 = vperm.xlu0 %99, %v86
    %v101 = vpop.permute.xlu0 %100
    %104 = vset.pattern.permute.xlu0 0
    %105 = vperm.xlu0 %104, %v87
    %v106 = vpop.permute.xlu0 %105
    %vm108 = vcmask 392192
    %v110 = vsel %vm108, %v74, 0
    %v113 = vsel %vm108, %v75, 0
    %v116 = vsel %vm108, %v76, 0
    %v119 = vsel %vm108, %v77, 0
    %121 = vmatprep.subr.mxu0 0.0
    %122 = vmatpush1.msra.mxu0 %v78
    %123 = vmatprep.subr.mxu0 0.0
    %124 = vmatpush1.msra.mxu0 %v79
    %125 = vmatprep.subr.mxu0 0.0
    %126 = vmatpush1.msra.mxu0 %v80
    %127 = vmatprep.subr.mxu0 0.0
    %128 = vmatpush1.msra.mxu0 %v81
    %129 = vmatprep.subr.mxu0 0.0
    %130 = vmatpush1.msra.mxu0 %v82
    %131 = vmatprep.subr.mxu0 0.0
    %132 = vmatpush1.msra.mxu0 %v83
    %133 = vmatprep.subr.mxu0 0.0
    %134 = vmatpush1.msra.mxu0 0.0
    %135 = vmatprep.subr.mxu0 0.0
    %136 = vmatpush1.msra.mxu0 0.0
    %137 = vmatprep.subr.mxu0 0.0
    %138 = vmatpush1.msra.mxu0 0.0
    %139 = vmatprep.subr.mxu0 0.0
    %140 = vmatpush1.msra.mxu0 0.0
    %141 = vmatprep.subr.mxu0 0.0
    %142 = vmatpush1.msra.mxu0 0.0
    %143 = vmatprep.subr.mxu0 0.0
    %144 = vmatpush1.msra.mxu0 0.0
    %145 = vmatprep.subr.mxu0 0.0
    %146 = vmatpush1.msra.mxu0 0.0
    %147 = vmatprep.subr.mxu0 0.0
    %148 = vmatpush1.msra.mxu0 0.0
    %149 = vmatprep.subr.mxu0 0.0
    %150 = vmatpush1.msra.mxu0 0.0
    %151 = vmatprep.subr.mxu0 0.0
    %152 = vmatpush1.msra.mxu0 0.0
    %153 = vmatprep.subr.mxu0 0.0
    %154 = vmatpush1.msra.mxu0 0.0
    %155 = vmatprep.subr.mxu0 0.0
    %156 = vmatpush1.msra.mxu0 0.0
    %157 = vmatprep.subr.mxu0 0.0
    %158 = vmatpush1.msra.mxu0 0.0
    %159 = vmatprep.subr.mxu0 0.0
    %160 = vmatpush1.msra.mxu0 0.0
    %161 = vmatprep.subr.mxu0 0.0
    %162 = vmatpush1.msra.mxu0 0.0
    %163 = vmatprep.subr.mxu0 0.0
    %164 = vmatpush1.msra.mxu0 0.0
    %165 = vmatprep.subr.mxu0 0.0
    %166 = vmatpush1.msra.mxu0 0.0
    %167 = vmatprep.subr.mxu0 0.0
    %168 = vmatpush1.msra.mxu0 0.0
    %169 = vmatprep.subr.mxu0 0.0
    %170 = vmatpush1.msra.mxu0 0.0
    %171 = vmatprep.subr.mxu0 0.0
    %172 = vmatpush1.msra.mxu0 0.0
    %173 = vmatprep.subr.mxu0 0.0
    %174 = vmatpush1.msra.mxu0 0.0
    %175 = vmatprep.subr.mxu0 0.0
    %176 = vmatpush1.msra.mxu0 0.0
    %177 = vmatprep.subr.mxu0 0.0
    %178 = vmatpush1.msra.mxu0 0.0
    %179 = vmatprep.subr.mxu0 0.0
    %180 = vmatpush1.msra.mxu0 0.0
    %181 = vmatprep.subr.mxu0 0.0
    %182 = vmatpush1.msra.mxu0 0.0
    %183 = vmatprep.subr.mxu0 0.0
    %184 = vmatpush1.msra.mxu0 0.0
    %185 = vmatprep.mubr.f32.mxu0 0.0
    %186 = vmatmul.mubr.f32.gmra.mrb[0].mxu0 %v110
    %v187 = vpop.f32.mrb[0].mxu0
    %v188 = vadd.f32 %v91, %v187
    %v189 = vpop.f32.mrb[0].mxu0
    %190 = vmatprep.mubr.f32.mxu0 0.0
    %191 = vmatmul.mubr.f32.gmra.mrb[0].mxu0 %v113
    %v192 = vpop.f32.mrb[0].mxu0
    %v193 = vadd.f32 %v96, %v192
    %v194 = vpop.f32.mrb[0].mxu0
    %195 = vmatprep.mubr.f32.mxu0 0.0
    %196 = vmatmul.mubr.f32.gmra.mrb[0].mxu0 %v116
    %v197 = vpop.f32.mrb[0].mxu0
    %v198 = vadd.f32 %v101, %v197
    %v199 = vpop.f32.mrb[0].mxu0
    %200 = vmatprep.mubr.f32.mxu0 0.0
    %201 = vmatmul.mubr.f32.gmra.mrb[0].mxu0 %v119
    %v202 = vpop.f32.mrb[0].mxu0
    %v203 = vadd.f32 %v106, %v202
    %v204 = vpop.f32.mrb[0].mxu0
    %205 = vdwg.mxu0
    %206 = vst [vmem:[%s4] sm:$0xff] %v188
    %207 = vst [vmem:[%s4 + $0x8] sm:$0xff] %v193
    %208 = vst [vmem:[%s4 + $0x10] sm:$0xff] %v198
    %209 = vst [vmem:[%s4 + $0x18] sm:$0xff] %v203
    // Predicated region
    $region14: #{patch_embed.2} parent=1 // pred_check
      _
    $region15: #{patch_embed.2} parent=1 // pred_check_branch
      %211 = sbr.rel (0) target = $region17
    $region16: #{patch_embed.2} parent=1 // pred_region
      _
    $region17: #{patch_embed.2} parent=1 // pred_fallthru
      _
    // Predicated region
    $region18: #{patch_embed.2} parent=1 // pred_check
      _
    $region19: #{patch_embed.2} parent=1 // pred_check_branch
      %213 = sbr.rel (0) target = $region21
    $region20: #{patch_embed.2} parent=1 // pred_region
      _
    $region21: #{patch_embed.2} parent=1 // pred_fallthru
      _

</llo_original>
